<compile_context>
chip_gen: v6e
topology: v6e:2x2x1
jax: 0.10.0
libtpu: 0.0.40
codegen_flags: <defaults>
</compile_context>

<pallas_src>
import functools
import math

import jax
import jax.numpy as jnp
from jax import lax
from jax.experimental import pallas as pl
from jax.experimental.pallas import tpu as pltpu

EPS = 1e-5
NUM_DOMAINS = 3
MAX_TM_MATMUL = 256           # rows per Pass-A (MXU) tile
MAX_TM_ELEM = 1024            # rows per elementwise tile (Pass B / maxpool)
VMEM_LIMIT = 32 * 1024 * 1024  # worst case Pass-A footprint ~15 MiB (stage 4)


def _round_up(x, m):
    return (x + m - 1) // m * m


def _choose_m_tiling(M, max_tm):
    mp = _round_up(M, 8)
    if mp <= max_tm:
        return mp, mp
    return _round_up(M, max_tm), max_tm


def _elem_tile(Mp, cap=MAX_TM_ELEM):
    """Largest tile <= cap dividing Mp (Mp is always a multiple of 8)."""
    if Mp <= cap:
        return Mp
    for t in (1024, 512, 256, 128, 64, 32, 16, 8):
        if t <= cap and Mp % t == 0:
            return t
    return 8


# ----------------------------------------------------------------------------
# Pass A: weight-resident full-K MXU matmul + partial BN stats, bf16 y out.
# ----------------------------------------------------------------------------
def _matmul_stats_kernel(p_ref, w_ref, y_ref, s_ref):
    # Single full-depth dot per M tile; the weight block index is constant
    # across the grid, so Pallas fetches it into VMEM only once.
    acc = jnp.dot(p_ref[...], w_ref[...], preferred_element_type=jnp.float32)
    y_ref[...] = acc.astype(y_ref.dtype)
    # Per-tile BN partial statistics.  Padded M rows of the patches are exactly
    # zero, so no masking is needed.  Only rows 0/1 of the 8-row block are used.
    s_ref[0:1, :] = jnp.sum(acc, axis=0, keepdims=True)
    s_ref[1:2, :] = jnp.sum(acc * acc, axis=0, keepdims=True)


def conv_matmul_stats(patches_bf16, w_bf16, TM):
    Mp, Kp = patches_bf16.shape
    Kw, Cp = w_bf16.shape
    nm = Mp // TM
    y, stats = pl.pallas_call(
        _matmul_stats_kernel,
        out_shape=(jax.ShapeDtypeStruct((Mp, Cp), jnp.bfloat16),
                   jax.ShapeDtypeStruct((nm * 8, Cp), jnp.float32)),
        grid_spec=pltpu.PrefetchScalarGridSpec(
            num_scalar_prefetch=0,
            grid=(nm,),
            in_specs=[
                pl.BlockSpec((TM, Kp), lambda i: (i, 0)),
                pl.BlockSpec((Kw, Cp), lambda i: (0, 0)),   # weight resident
            ],
            out_specs=[
                pl.BlockSpec((TM, Cp), lambda i: (i, 0)),
                pl.BlockSpec((8, Cp), lambda i: (i, 0)),
            ],
        ),
        compiler_params=pltpu.CompilerParams(
            dimension_semantics=("parallel",),
            vmem_limit_bytes=VMEM_LIMIT),
    )(patches_bf16, w_bf16)
    return y, stats


# ----------------------------------------------------------------------------
# Pass B: normalize + (residual) + ReLU, large M tiles, bf16 output.
# ----------------------------------------------------------------------------
def _bn_act_kernel(y_ref, sc_ref, sh_ref, o_ref, *, apply_relu):
    out = y_ref[...].astype(jnp.float32) * sc_ref[...] + sh_ref[...]
    if apply_relu:
        out = jnp.maximum(out, 0.0)
    o_ref[...] = out.astype(o_ref.dtype)


def _bn_act_res_kernel(y_ref, sc_ref, sh_ref, r_ref, o_ref, *, apply_relu):
    out = (y_ref[...].astype(jnp.float32) * sc_ref[...] + sh_ref[...]
           + r_ref[...].astype(jnp.float32))
    if apply_relu:
        out = jnp.maximum(out, 0.0)
    o_ref[...] = out.astype(o_ref.dtype)


def bn_act(y, scale_p, shift_p, residual, apply_relu):
    Mp, Cp = y.shape
    TM = _elem_tile(Mp)
    nm = Mp // TM
    sc = scale_p.reshape(1, Cp)
    sh = shift_p.reshape(1, Cp)
    in_specs = [
        pl.BlockSpec((TM, Cp), lambda i: (i, 0)),
        pl.BlockSpec((1, Cp), lambda i: (0, 0)),
        pl.BlockSpec((1, Cp), lambda i: (0, 0)),
    ]
    if residual is None:
        kernel = functools.partial(_bn_act_kernel, apply_relu=apply_relu)
        args = (y, sc, sh)
    else:
        kernel = functools.partial(_bn_act_res_kernel, apply_relu=apply_relu)
        args = (y, sc, sh, residual)
        in_specs = in_specs + [pl.BlockSpec((TM, Cp), lambda i: (i, 0))]
    return pl.pallas_call(
        kernel,
        out_shape=jax.ShapeDtypeStruct((Mp, Cp), jnp.bfloat16),
        grid_spec=pltpu.PrefetchScalarGridSpec(
            num_scalar_prefetch=0,
            grid=(nm,),
            in_specs=in_specs,
            out_specs=pl.BlockSpec((TM, Cp), lambda i: (i, 0)),
        ),
        compiler_params=pltpu.CompilerParams(
            dimension_semantics=("parallel",)),
    )(*args)


# ----------------------------------------------------------------------------
# MaxPool 3x3 / stride 2 / pad 1: kw-max fused in XLA, kh-max in Pallas.
# ----------------------------------------------------------------------------
def _maxpool_kernel(p_ref, o_ref):
    o_ref[...] = jnp.maximum(jnp.maximum(p_ref[0], p_ref[1]), p_ref[2])


def maxpool_3x3_s2_p1(x):
    # x: NHWC bf16
    N, H, W, C = x.shape
    OH = (H + 2 - 3) // 2 + 1
    OW = (W + 2 - 3) // 2 + 1
    neg = float(jnp.finfo(jnp.bfloat16).min)
    xp = jnp.pad(x, ((0, 0), (1, 1), (1, 1), (0, 0)), constant_values=neg)
    # kw reduction: one fused elementwise max over 3 strided views.
    cmax = jnp.maximum(
        jnp.maximum(xp[:, :, 0:2 * OW - 1:2, :], xp[:, :, 1:2 * OW:2, :]),
        xp[:, :, 2:2 * OW + 1:2, :])                       # (N, H+2, OW, C)
    rows = [cmax[:, kh:kh + 2 * (OH - 1) + 1:2, :, :].reshape(-1, C)
            for kh in range(3)]
    M = N * OH * OW
    Mp, TM = _choose_m_tiling(M, MAX_TM_ELEM)
    stacked = jnp.pad(jnp.stack(rows, axis=0), ((0, 0), (0, Mp - M), (0, 0)))
    out = pl.pallas_call(
        _maxpool_kernel,
        out_shape=jax.ShapeDtypeStruct((Mp, C), jnp.bfloat16),
        grid_spec=pltpu.PrefetchScalarGridSpec(
            num_scalar_prefetch=0,
            grid=(Mp // TM,),
            in_specs=[pl.BlockSpec((3, TM, C), lambda i: (0, i, 0))],
            out_specs=pl.BlockSpec((TM, C), lambda i: (i, 0)),
        ),
        compiler_params=pltpu.CompilerParams(
            dimension_semantics=("parallel",)),
    )(stacked)
    return out[:M].reshape(N, OH, OW, C)


# ----------------------------------------------------------------------------
# Glue: im2col, conv+bn wrapper, BasicBlock, parameter init, full forward
# ----------------------------------------------------------------------------
def im2col(x, KH, KW, stride, pad):
    N, H, W, C = x.shape
    OH = (H + 2 * pad - KH) // stride + 1
    OW = (W + 2 * pad - KW) // stride + 1
    xp = jnp.pad(x, ((0, 0), (pad, pad), (pad, pad), (0, 0)))
    cols = []
    for kh in range(KH):
        for kw in range(KW):
            cols.append(xp[:, kh:kh + stride * (OH - 1) + 1:stride,
                            kw:kw + stride * (OW - 1) + 1:stride, :])
    p = jnp.stack(cols, axis=3)                     # (N, OH, OW, KH*KW, C)
    return p.reshape(N * OH * OW, KH * KW * C), OH, OW


def _prep_conv(w_oihw, stride, padding):
    """Pre-transpose / pre-pad / pre-cast a conv weight once at init."""
    Cout, Cin, KH, KW = w_oihw.shape
    K = KH * KW * Cin
    Kp = _round_up(K, 128)
    Cp = _round_up(Cout, 128)
    wmat = jnp.transpose(w_oihw, (2, 3, 1, 0)).reshape(K, Cout).astype(jnp.bfloat16)
    w_pad = jnp.pad(wmat, ((0, Kp - K), (0, Cp - Cout)))
    return {'w': w_pad, 'K': K, 'Kp': Kp, 'Cout': Cout, 'Cp': Cp,
            'KH': KH, 'KW': KW, 'stride': stride, 'pad': padding}


def conv_bn(x, conv, gamma, beta, relu, residual=None, residual_is_padded=False):
    """x: NHWC bf16.  Returns (out_nhwc, out_padded2d) with out_padded2d in the
    lane-dense (Mp, Cp) bf16 layout (reusable as the next residual input)."""
    N = x.shape[0]
    Cout, Cp, K, Kp = conv['Cout'], conv['Cp'], conv['K'], conv['Kp']

    patches, OH, OW = im2col(x, conv['KH'], conv['KW'], conv['stride'], conv['pad'])
    M = N * OH * OW
    Mp, TM = _choose_m_tiling(M, MAX_TM_MATMUL)
    # Single pad of the patch matrix (rows for the M grid, lanes to 128-align
    # K); padded rows are exactly zero so the in-kernel BN stats need no mask.
    p_pad = jnp.pad(patches, ((0, Mp - M), (0, Kp - K)))

    # Pass A: weight-resident full-K matmul, bf16 activation + per-tile stats.
    y, stats = conv_matmul_stats(p_pad, conv['w'], TM)

    # BN finalize (train-mode batch stats, biased variance) — tiny, in XLA.
    nm = Mp // TM
    s = stats.reshape(nm, 8, Cp)
    total = jnp.sum(s[:, 0, :Cout], axis=0)
    total_sq = jnp.sum(s[:, 1, :Cout], axis=0)
    mean = total / jnp.float32(M)
    var = jnp.maximum(total_sq / jnp.float32(M) - mean * mean, 0.0)
    inv = lax.rsqrt(var + EPS)
    scale = gamma * inv
    shift = beta - mean * scale
    scale_p = jnp.zeros((Cp,), jnp.float32).at[:Cout].set(scale)
    shift_p = jnp.zeros((Cp,), jnp.float32).at[:Cout].set(shift)

    if residual is None:
        r_pad = None
    elif residual_is_padded:
        r_pad = residual                                    # already (Mp, Cp) bf16
    else:
        r2d = residual.reshape(M, -1).astype(jnp.bfloat16)
        r_pad = jnp.pad(r2d, ((0, Mp - M), (0, Cp - r2d.shape[1])))

    # Pass B: normalize + residual + ReLU, bf16 activation out.
    out2d = bn_act(y, scale_p, shift_p, r_pad, relu)
    out_nhwc = out2d[:M, :Cout].reshape(N, OH, OW, Cout)
    return out_nhwc, out2d


def basic_block(x, blk, d):
    out1, _ = conv_bn(x, blk['conv1'], blk['bn1'][0][d], blk['bn1'][1][d],
                      relu=True)
    if 'ds' in blk:
        # Reuse the downsample conv's padded (Mp, Cp) output directly as the
        # residual for conv2's Pass B (no slice / reshape / re-pad round trip).
        _, id_pad = conv_bn(x, blk['ds'], blk['ds_bn'][0][d], blk['ds_bn'][1][d],
                            relu=False)
        out2, _ = conv_bn(out1, blk['conv2'], blk['bn2'][0][d], blk['bn2'][1][d],
                          relu=True, residual=id_pad, residual_is_padded=True)
    else:
        out2, _ = conv_bn(out1, blk['conv2'], blk['bn2'][0][d], blk['bn2'][1][d],
                          relu=True, residual=x)
    return out2


def init_params(key, layers, num_domains=NUM_DOMAINS):
    keys = iter(jax.random.split(key, 128))

    def conv_w(k, cout, cin, kh, kw):
        # PyTorch init: normal(0, sqrt(2 / (kh*kw*out_channels)))
        std = math.sqrt(2.0 / (kh * kw * cout))
        return jax.random.normal(k, (cout, cin, kh, kw), jnp.float32) * std

    def bn(c):
        # PyTorch init: weight=1, bias=0 (one set per domain)
        return (jnp.ones((num_domains, c), jnp.float32),
                jnp.zeros((num_domains, c), jnp.float32))

    params = {'conv1': _prep_conv(conv_w(next(keys), 64, 1, 7, 7), 2, 3),
              'bn1': bn(64)}
    inplanes = 64
    stages = []
    for planes, nblocks, stride in zip([64, 128, 256, 512], layers, [1, 2, 2, 2]):
        blocks = []
        for b in range(nblocks):
            s = stride if b == 0 else 1
            blk = {'conv1': _prep_conv(conv_w(next(keys), planes, inplanes, 3, 3), s, 1),
                   'bn1': bn(planes),
                   'conv2': _prep_conv(conv_w(next(keys), planes, planes, 3, 3), 1, 1),
                   'bn2': bn(planes)}
            if s != 1 or inplanes != planes:        # BasicBlock.expansion == 1
                blk['ds'] = _prep_conv(conv_w(next(keys), planes, inplanes, 1, 1), s, 0)
                blk['ds_bn'] = bn(planes)
            blocks.append(blk)
            inplanes = planes
        stages.append(blocks)
    params['stages'] = stages
    return params


def resnet_basic2_forward(params, x_nchw, d_id, dropout=-1):
    # `dropout` is unused in the original forward as well.
    # Traced domain index (no int() host sync / per-domain retrace).
    d = jnp.asarray(d_id, dtype=jnp.int32).reshape(-1)[0]
    x = jnp.transpose(x_nchw, (0, 2, 3, 1)).astype(jnp.bfloat16)   # NCHW -> NHWC
    x, _ = conv_bn(x, params['conv1'], params['bn1'][0][d], params['bn1'][1][d],
                   relu=True)
    x = maxpool_3x3_s2_p1(x)
    for blocks in params['stages']:
        for blk in blocks:
            x = basic_block(x, blk, d)
    return jnp.transpose(x, (0, 3, 1, 2)).astype(jnp.float32)      # back to NCHW


if __name__ == "__main__":
    key = jax.random.PRNGKey(0)
    pkey, xkey = jax.random.split(key)
    layers = [1, 1, 1, 1]                 # small, ResNet-basic config
    params = init_params(pkey, layers)
    x = jax.random.normal(xkey, (2, 1, 32, 32), jnp.float32)       # NCHW, 1 channel
    d_id = jnp.array([0], jnp.int32)
    out = resnet_basic2_forward(params, x, d_id)
    out = jax.block_until_ready(out)
    assert out.shape == (2, 512, 1, 1), out.shape
    assert bool(jnp.all(jnp.isfinite(out)))
    print("KERNEL_OK")
</pallas_src>

<mosaic_0001>
module attributes {stable_mosaic.version = 11 : i64} {
  func.func @_matmul_stats_kernel(%arg0: i32, %arg1: memref<256x128xbf16, #tpu.memory_space<vmem>>, %arg2: memref<128x128xbf16, #tpu.memory_space<vmem>>, %arg3: memref<256x128xbf16, #tpu.memory_space<vmem>>, %arg4: memref<8x128xf32, #tpu.memory_space<vmem>>) attributes {dimension_semantics = [#tpu.dimension_semantics<parallel>], iteration_bounds = array<i64: 2>, scalar_prefetch = 0 : i64, scratch_operands = 0 : i64, tpu.core_type = #tpu.core_type<tc>, window_params = [{transform_indices = @transform_0, window_bounds = array<i64: 256, 128>}, {pipeline_mode = #tpu.pipeline_mode<synchronous>, transform_indices = @transform_1, window_bounds = array<i64: 128, 128>}, {transform_indices = @transform_2, window_bounds = array<i64: 256, 128>}, {transform_indices = @transform_3, window_bounds = array<i64: 8, 128>}]} {
    %c0 = arith.constant 0 : index
    %c0_0 = arith.constant 0 : index
    %0 = vector.load %arg1[%c0, %c0_0] : memref<256x128xbf16, #tpu.memory_space<vmem>>, vector<256x128xbf16>
    %c0_1 = arith.constant 0 : index
    %c0_2 = arith.constant 0 : index
    %1 = vector.load %arg2[%c0_1, %c0_2] : memref<128x128xbf16, #tpu.memory_space<vmem>>, vector<128x128xbf16>
    %cst = arith.constant dense<0.000000e+00> : vector<256x128xf32>
    %2 = tpu.matmul %0, %1, %cst {dimension_numbers = #tpu.dot_dimension_numbers<[1], [0], [0], [1], [0, 0, 1, 1], [], []>} : vector<256x128xbf16>, vector<128x128xbf16>, vector<256x128xf32> -> vector<256x128xf32>
    %3 = arith.truncf %2 : vector<256x128xf32> to vector<256x128xbf16>
    %c0_3 = arith.constant 0 : index
    %c0_4 = arith.constant 0 : index
    %4 = vector.load %arg3[%c0_3, %c0_4] : memref<256x128xbf16, #tpu.memory_space<vmem>>, vector<256x128xbf16>
    tpu.vector_store %arg3[%c0_3, %c0_4], %3 {strides = array<i32>} : memref<256x128xbf16, #tpu.memory_space<vmem>>, vector<256x128xbf16>,
    %cst_5 = arith.constant dense<0.000000e+00> : vector<128xf32>
    %5 = vector.multi_reduction <add>, %2, %cst_5 [0] : vector<256x128xf32> to vector<128xf32>
    %6 = vector.shape_cast %5 : vector<128xf32> to vector<1x128xf32>
    %c0_6 = arith.constant 0 : index
    %c0_7 = arith.constant 0 : index
    %7 = vector.load %arg4[%c0_6, %c0_7] : memref<8x128xf32, #tpu.memory_space<vmem>>, vector<1x128xf32>
    tpu.vector_store %arg4[%c0_6, %c0_7], %6 {strides = array<i32>} : memref<8x128xf32, #tpu.memory_space<vmem>>, vector<1x128xf32>,
    %8 = arith.mulf %2, %2 : vector<256x128xf32>
    %cst_8 = arith.constant dense<0.000000e+00> : vector<128xf32>
    %9 = vector.multi_reduction <add>, %8, %cst_8 [0] : vector<256x128xf32> to vector<128xf32>
    %10 = vector.shape_cast %9 : vector<128xf32> to vector<1x128xf32>
    %c1 = arith.constant 1 : index
    %c0_9 = arith.constant 0 : index
    %11 = vector.load %arg4[%c1, %c0_9] : memref<8x128xf32, #tpu.memory_space<vmem>>, vector<1x128xf32>
    tpu.vector_store %arg4[%c1, %c0_9], %10 {strides = array<i32>} : memref<8x128xf32, #tpu.memory_space<vmem>>, vector<1x128xf32>,
    return
  }
  func.func @transform_0(%arg0: i32) -> (i32, i32) {
    %c0_i32 = arith.constant 0 : i32
    %c0_i32_0 = arith.constant 0 : i32
    return %arg0, %c0_i32 : i32, i32
  }
  func.func @transform_1(%arg0: i32) -> (i32, i32) {
    %c0_i32 = arith.constant 0 : i32
    %c0_i32_0 = arith.constant 0 : i32
    %c0_i32_1 = arith.constant 0 : i32
    return %c0_i32, %c0_i32_0 : i32, i32
  }
  func.func @transform_2(%arg0: i32) -> (i32, i32) {
    %c0_i32 = arith.constant 0 : i32
    %c0_i32_0 = arith.constant 0 : i32
    return %arg0, %c0_i32 : i32, i32
  }
  func.func @transform_3(%arg0: i32) -> (i32, i32) {
    %c0_i32 = arith.constant 0 : i32
    %c0_i32_0 = arith.constant 0 : i32
    return %arg0, %c0_i32 : i32, i32
  }
}

</mosaic_0001>

<llo_original>
// kernel: tpu_custom_call.1
$region0: #{tpu_custom_call.1}
  #allocation0 [shape = 'u32[]', space=smem, size = 0x4, offset = 0x4, fixed_abs, tag = 'smem constant byte address 0x4 - core index']
  #allocation1 [shape = 'u32[144,128]{1,0:T(1,128)}', space=vmem, size = 0x12000, scoped, tag = 'internal scratch']
  %s0 = inlined_call_operand.hbm [shape: bf16[512,128], index: 0, kind: input, shape index: {}]
  %s1 = inlined_call_operand.hbm [shape: bf16[128,128], index: 1, kind: input, shape index: {}]
  %s2 = inlined_call_operand.hbm [shape: bf16[512,128], index: 2, kind: output, shape index: {0}]
  %s3 = inlined_call_operand.hbm [shape: f32[16,128], index: 3, kind: output, shape index: {1}]
  %4 = xla_tuple %s2, %s3
  %s5 = sld [smem:[#allocation0]]
  $region57: #{tpu_custom_call.1} parent=0
    _
  %s7 = ssub.s32 1, %s5
  %s8 = scalar_select 0, %s7, %s5
  $region1: #{tpu_custom_call.1} parent=0
    #allocation2 [shape = 'u8[131072]{0}', space=vmem, size = 0x20000, scoped, tag = 'input window, operand 0']
    #allocation3 [shape = 's32[2]{0}', space=sflag, size = 0x8, scoped, tag = 'scoped memory for tpu_custom_call.1']
    #allocation4 [shape = 's32[2]{0}', space=sflag, size = 0x8, scoped, tag = 'scoped memory for tpu_custom_call.1']
    #allocation5 [shape = 'u8[32768]{0}', space=vmem, size = 0x8000, scoped, tag = 'input window, operand 1, single buffered']
    #allocation6 [shape = 's32[1]{0}', space=sflag, size = 0x4, scoped, tag = 'scoped memory for tpu_custom_call.1']
    #allocation7 [shape = 'u8[131072]{0}', space=vmem, size = 0x20000, scoped, tag = 'output window, operand 0']
    #allocation8 [shape = 'u8[8192]{0}', space=vmem, size = 0x2000, scoped, tag = 'output window, operand 1']
    #allocation9 [shape = 's32[2]{0}', space=sflag, size = 0x8, scoped, tag = 'scoped memory for tpu_custom_call.1']
    %9 = vsyncpa [#allocation3], 0
    %s10 = scalar_lea.sflag [#allocation3], 1
    %11 = vsyncpa %s10, 0
    %12 = vsyncpa [#allocation6], 0
    %13 = vsyncpa [#allocation4], 0
    %s14 = scalar_lea.sflag [#allocation4], 1
    %15 = vsyncpa %s14, 0
    %16 = vsyncpa [#allocation9], 0
    %s17 = scalar_lea.sflag [#allocation9], 1
    %18 = vsyncpa %s17, 0
    loop: start=0, step=1, limit=4
    $region2: #{tpu_custom_call.1} parent=1 // loop_pre_header
      _
    $region3: #{tpu_custom_call.1} parent=1 // loop_header
      %s20 = sphi 0, %s24
      %p21 = scmp.ge.s32.totalorder %s20, 4
      %s30 = sphi 0, %s32
      %s33 = sphi 0, %s30
      %s34 = sphi 0, %s33
      %s50 = sphi 0, %s34
      %s54 = sphi 0, %s54
      %s56 = sphi 0, %s54
      %s57 = sphi 0, %s56
      %s71 = sphi 0, %s57
      %s77 = sphi 0, %s79
      %s80 = sphi 0, %s77
      %s81 = sphi 0, %s80
      %s97 = sphi 0, %s81
      %s103 = sphi 0, %s105
      %s106 = sphi 0, %s103
      %s107 = sphi 0, %s106
      %s123 = sphi 0, %s107
    $region4: #{tpu_custom_call.1} parent=1 // loop_header_branch
      %23 = sbr.rel (%p21) target = $region8
    $region5: #{tpu_custom_call.1} parent=1 // loop_body
      %s25 = ssub.s32 %s20, 1
      %s26 = ssub.s32 %s20, 2
      %s27 = sadd.s32 %s20, 1
      %s28 = ssub.s32 %s20, %s27
      %p29 = scmp.eq.s32.totalorder %s28, 0
      %s31 = sadd.s32 %s30, 1
      %s32 = scalar_select %p29, %s30, %s31
      %p35 = pneg %p29
      %p36 = scmp.eq.s32.totalorder %s20, 1
      %p37 = por %p35, %p36
      %p38 = scmp.ne.s32.totalorder %s30, %s33
      %p39 = scmp.eq.s32.totalorder %s20, 0
      %p40 = por %p38, %p39
      %p41 = scmp.ne.s32.totalorder %s30, %s33
      %p42 = scmp.eq.s32.totalorder %s25, 1
      %p43 = por %p41, %p42
      %p44 = scmp.ne.s32.totalorder %s33, %s34
      %p45 = scmp.eq.s32.totalorder %s25, 0
      %p46 = por %p44, %p45
      %p47 = scmp.ne.s32.totalorder %s33, %s34
      %p48 = scmp.eq.s32.totalorder %s26, 1
      %p49 = por %p47, %p48
      %p51 = scmp.ne.s32.totalorder %s34, %s50
      %p52 = scmp.eq.s32.totalorder %s26, 0
      %p53 = por %p51, %p52
      %s55 = sadd.s32 %s54, 1
      %p58 = scmp.eq.s32.totalorder %s20, 1
      %p59 = scmp.ne.s32.totalorder %s54, %s56
      %p60 = scmp.eq.s32.totalorder %s20, 0
      %p61 = por %p59, %p60
      %p62 = scmp.ne.s32.totalorder %s54, %s56
      %p63 = scmp.eq.s32.totalorder %s25, 1
      %p64 = por %p62, %p63
      %p65 = scmp.ne.s32.totalorder %s56, %s57
      %p66 = scmp.eq.s32.totalorder %s25, 0
      %p67 = por %p65, %p66
      %p68 = scmp.ne.s32.totalorder %s56, %s57
      %p69 = scmp.eq.s32.totalorder %s26, 1
      %p70 = por %p68, %p69
      %p72 = scmp.ne.s32.totalorder %s57, %s71
      %p73 = scmp.eq.s32.totalorder %s26, 0
      %p74 = por %p72, %p73
      %s75 = ssub.s32 %s20, %s27
      %p76 = scmp.eq.s32.totalorder %s75, 0
      %s78 = sadd.s32 %s77, 1
      %s79 = scalar_select %p76, %s77, %s78
      %p82 = pneg %p76
      %p83 = scmp.eq.s32.totalorder %s20, 1
      %p84 = por %p82, %p83
      %p85 = scmp.ne.s32.totalorder %s77, %s80
      %p86 = scmp.eq.s32.totalorder %s20, 0
      %p87 = por %p85, %p86
      %p88 = scmp.ne.s32.totalorder %s77, %s80
      %p89 = scmp.eq.s32.totalorder %s25, 1
      %p90 = por %p88, %p89
      %p91 = scmp.ne.s32.totalorder %s80, %s81
      %p92 = scmp.eq.s32.totalorder %s25, 0
      %p93 = por %p91, %p92
      %p94 = scmp.ne.s32.totalorder %s80, %s81
      %p95 = scmp.eq.s32.totalorder %s26, 1
      %p96 = por %p94, %p95
      %p98 = scmp.ne.s32.totalorder %s81, %s97
      %p99 = scmp.eq.s32.totalorder %s26, 0
      %p100 = por %p98, %p99
      %s101 = ssub.s32 %s20, %s27
      %p102 = scmp.eq.s32.totalorder %s101, 0
      %s104 = sadd.s32 %s103, 1
      %s105 = scalar_select %p102, %s103, %s104
      %p108 = pneg %p102
      %p109 = scmp.eq.s32.totalorder %s20, 1
      %p110 = por %p108, %p109
      %p111 = scmp.ne.s32.totalorder %s103, %s106
      %p112 = scmp.eq.s32.totalorder %s20, 0
      %p113 = por %p111, %p112
      %p114 = scmp.ne.s32.totalorder %s103, %s106
      %p115 = scmp.eq.s32.totalorder %s25, 1
      %p116 = por %p114, %p115
      %p117 = scmp.ne.s32.totalorder %s106, %s107
      %p118 = scmp.eq.s32.totalorder %s25, 0
      %p119 = por %p117, %p118
      %p120 = scmp.ne.s32.totalorder %s106, %s107
      %p121 = scmp.eq.s32.totalorder %s26, 1
      %p122 = por %p120, %p121
      %p124 = scmp.ne.s32.totalorder %s107, %s123
      %p125 = scmp.eq.s32.totalorder %s26, 0
      %p126 = por %p124, %p125
      %p127 = scmp.le.s32.totalorder 1, %s20
      %p128 = scmp.lt.s32.totalorder %s20, 3
      %p129 = pnand %p127, %p128
      %p130 = pneg %p129
      // Predicated region
      $region9: #{tpu_custom_call.1} parent=5 // pred_check
        _
      $region10: #{tpu_custom_call.1} parent=5 // pred_check_branch
        %132 = sbr.rel (%p129) target = $region12
      $region11: #{tpu_custom_call.1} parent=5 // pred_region
        %s133 = ssub.s32 %s20, 1
        // Predicated region
        $region13: #{tpu_custom_call.1} parent=11 // pred_check
          %p134 = pneg %p67
        $region14: #{tpu_custom_call.1} parent=11 // pred_check_branch
          %136 = sbr.rel (%p134) target = $region16
        $region15: #{tpu_custom_call.1} parent=11 // pred_region
          %s138 = ssub.s32 1024, 1024
          %139 = vsyncadd [#allocation6], %s138
          %s140 = sshll.u32 [#allocation5], 4
          %s141 = int_to_ptr.vmem [resolvable:$true] %s140
          %146 = dma.hbm_to_vmem [thread:$0]  %s1, 1024, %s141, [#allocation6], 64, 64, 4
        $region16: #{tpu_custom_call.1} parent=11 // pred_fallthru
          _
      $region12: #{tpu_custom_call.1} parent=5 // pred_fallthru
        _
      %p147 = scmp.lt.s32.totalorder %s20, 2
      // Predicated region
      $region17: #{tpu_custom_call.1} parent=5 // pred_check
        %p148 = pneg %p147
      $region18: #{tpu_custom_call.1} parent=5 // pred_check_branch
        %150 = sbr.rel (%p148) target = $region20
      $region19: #{tpu_custom_call.1} parent=5 // pred_region
        // Predicated region
        $region21: #{tpu_custom_call.1} parent=19 // pred_check
          %p151 = pneg %p40
        $region22: #{tpu_custom_call.1} parent=19 // pred_check_branch
          %153 = sbr.rel (%p151) target = $region24
        $region23: #{tpu_custom_call.1} parent=19 // pred_region
          %s154 = sand.u32 %s30, 1
          %s155 = scalar_lea.sflag [#allocation3], %s154
          %s156 = sand.u32 %s30, 1
          %s157 = smul.addr %s156, 128
          %s158 = scalar_lea.vmem [#allocation2], %s157
          %s159 = smul.u32 32, %s20
          %s161 = ssub.s32 2048, 2048
          %162 = vsyncadd %s155, %s161
          %s163 = smul.addr %s159, 64
          %s164 = scalar_lea.hbm %s0, %s163
          %s165 = sshll.u32 %s158, 4
          %s166 = int_to_ptr.vmem [resolvable:$true] %s165
          %171 = dma.hbm_to_vmem [thread:$0]  %s164, 2048, %s166, %s155, 64, 64, 4
        $region24: #{tpu_custom_call.1} parent=19 // pred_fallthru
          _
      $region20: #{tpu_custom_call.1} parent=5 // pred_fallthru
        _
      %p172 = scmp.le.s32.totalorder 1, %s20
      %p173 = scmp.lt.s32.totalorder %s20, 3
      %p174 = pnand %p172, %p173
      %p175 = pneg %p174
      // Predicated region
      $region25: #{tpu_custom_call.1} parent=5 // pred_check
        _
      $region26: #{tpu_custom_call.1} parent=5 // pred_check_branch
        %177 = sbr.rel (%p174) target = $region28
      $region27: #{tpu_custom_call.1} parent=5 // pred_region
        %s178 = ssub.s32 %s20, 1
        %s179 = sand.u32 %s33, 1
        %s180 = scalar_lea.sflag [#allocation3], %s179
        %s181 = sand.u32 %s33, 1
        %s182 = smul.addr %s181, 128
        %s183 = scalar_lea.vmem [#allocation2], %s182
        // Predicated region
        $region29: #{tpu_custom_call.1} parent=27 // pred_check
          %p184 = pneg %p46
        $region30: #{tpu_custom_call.1} parent=27 // pred_check_branch
          %186 = sbr.rel (%p184) target = $region32
        $region31: #{tpu_custom_call.1} parent=27 // pred_region
          %187 = dma.done %s180, 2048
        $region32: #{tpu_custom_call.1} parent=27 // pred_fallthru
          _
        // Predicated region
        $region33: #{tpu_custom_call.1} parent=27 // pred_check
          %p188 = pneg %p67
        $region34: #{tpu_custom_call.1} parent=27 // pred_check_branch
          %190 = sbr.rel (%p188) target = $region36
        $region35: #{tpu_custom_call.1} parent=27 // pred_region
          %191 = dma.done [#allocation6], 1024
        $region36: #{tpu_custom_call.1} parent=27 // pred_fallthru
          _
        %s192 = sand.u32 %s33, 1
        %s193 = scalar_lea.sflag [#allocation3], %s192
        %s194 = sand.u32 %s33, 1
        %s195 = smul.addr %s194, 128
        %s196 = scalar_lea.vmem [#allocation2], %s195
        %p197 = pneg %p46
        %p198 = pneg %p43
        %p199 = pneg %p67
        %p200 = pneg %p64
        %p201 = pneg %p93
        %p202 = pneg %p90
        %s203 = sand.u32 %s80, 1
        %s204 = scalar_lea.sflag [#allocation4], %s203
        %s205 = sand.u32 %s80, 1
        %s206 = smul.addr %s205, 128
        %s207 = scalar_lea.vmem [#allocation7], %s206
        %p208 = pneg %p119
        %p209 = pneg %p116
        %s210 = sand.u32 %s106, 1
        %s211 = scalar_lea.sflag [#allocation9], %s210
        %s212 = sand.u32 %s106, 1
        %s213 = smul.addr %s212, 8
        %s214 = scalar_lea.vmem [#allocation8], %s213
        %s215 = smul.u32 32, %s25
        %s216 = smul.u32 32, %s25
        %v218 = vld [vmem:[%s183] sm:$0xf]
        %v219 = vld [vmem:[%s183 + $0x4] sm:$0xf]
        %v220 = vld [vmem:[%s183 + $0x8] sm:$0xf]
        %v221 = vld [vmem:[%s183 + $0xc] sm:$0xf]
        %v222 = vld [vmem:[%s183 + $0x10] sm:$0xf]
        %v223 = vld [vmem:[%s183 + $0x14] sm:$0xf]
        %v224 = vld [vmem:[%s183 + $0x18] sm:$0xf]
        %v225 = vld [vmem:[%s183 + $0x1c] sm:$0xf]
        %v226 = vld [vmem:[%s183 + $0x20] sm:$0xf]
        %v227 = vld [vmem:[%s183 + $0x24] sm:$0xf]
        %v228 = vld [vmem:[%s183 + $0x28] sm:$0xf]
        %v229 = vld [vmem:[%s183 + $0x2c] sm:$0xf]
        %v230 = vld [vmem:[%s183 + $0x30] sm:$0xf]
        %v231 = vld [vmem:[%s183 + $0x34] sm:$0xf]
        %v232 = vld [vmem:[%s183 + $0x38] sm:$0xf]
        %v233 = vld [vmem:[%s183 + $0x3c] sm:$0xf]
        %v234 = vld [vmem:[%s183 + $0x40] sm:$0xf]
        %v235 = vld [vmem:[%s183 + $0x44] sm:$0xf]
        %v236 = vld [vmem:[%s183 + $0x48] sm:$0xf]
        %v237 = vld [vmem:[%s183 + $0x4c] sm:$0xf]
        %v238 = vld [vmem:[%s183 + $0x50] sm:$0xf]
        %v239 = vld [vmem:[%s183 + $0x54] sm:$0xf]
        %v240 = vld [vmem:[%s183 + $0x58] sm:$0xf]
        %v241 = vld [vmem:[%s183 + $0x5c] sm:$0xf]
        %v242 = vld [vmem:[%s183 + $0x60] sm:$0xf]
        %v243 = vld [vmem:[%s183 + $0x64] sm:$0xf]
        %v244 = vld [vmem:[%s183 + $0x68] sm:$0xf]
        %v245 = vld [vmem:[%s183 + $0x6c] sm:$0xf]
        %v246 = vld [vmem:[%s183 + $0x70] sm:$0xf]
        %v247 = vld [vmem:[%s183 + $0x74] sm:$0xf]
        %v248 = vld [vmem:[%s183 + $0x78] sm:$0xf]
        %v249 = vld [vmem:[%s183 + $0x7c] sm:$0xf]
        %v250 = vld [vmem:[#allocation5] sm:$0xf]
        %v251 = vld [vmem:[#allocation5 + $0x4] sm:$0xf]
        %v252 = vld [vmem:[#allocation5 + $0x8] sm:$0xf]
        %v253 = vld [vmem:[#allocation5 + $0xc] sm:$0xf]
        %v254 = vld [vmem:[#allocation5 + $0x10] sm:$0xf]
        %v255 = vld [vmem:[#allocation5 + $0x14] sm:$0xf]
        %v256 = vld [vmem:[#allocation5 + $0x18] sm:$0xf]
        %v257 = vld [vmem:[#allocation5 + $0x1c] sm:$0xf]
        %v258 = vld [vmem:[#allocation5 + $0x20] sm:$0xf]
        %v259 = vld [vmem:[#allocation5 + $0x24] sm:$0xf]
        %v260 = vld [vmem:[#allocation5 + $0x28] sm:$0xf]
        %v261 = vld [vmem:[#allocation5 + $0x2c] sm:$0xf]
        %v262 = vld [vmem:[#allocation5 + $0x30] sm:$0xf]
        %v263 = vld [vmem:[#allocation5 + $0x34] sm:$0xf]
        %v264 = vld [vmem:[#allocation5 + $0x38] sm:$0xf]
        %v265 = vld [vmem:[#allocation5 + $0x3c] sm:$0xf]
        %v298 = vunpack.c.l.b16 %v218
        %v299 = vunpack.c.l.b16 %v219
        %v300 = vunpack.c.l.b16 %v220
        %v301 = vunpack.c.l.b16 %v221
        %v302 = vunpack.c.l.b16 %v222
        %v303 = vunpack.c.l.b16 %v223
        %v304 = vunpack.c.l.b16 %v224
        %v305 = vunpack.c.l.b16 %v225
        %v306 = vunpack.c.l.b16 %v226
        %v307 = vunpack.c.l.b16 %v227
        %v308 = vunpack.c.l.b16 %v228
        %v309 = vunpack.c.l.b16 %v229
        %v310 = vunpack.c.l.b16 %v230
        %v311 = vunpack.c.l.b16 %v231
        %v312 = vunpack.c.l.b16 %v232
        %v313 = vunpack.c.l.b16 %v233
        %v314 = vunpack.c.l.b16 %v234
        %v315 = vunpack.c.l.b16 %v235
        %v316 = vunpack.c.l.b16 %v236
        %v317 = vunpack.c.l.b16 %v237
        %v318 = vunpack.c.l.b16 %v238
        %v319 = vunpack.c.l.b16 %v239
        %v320 = vunpack.c.l.b16 %v240
        %v321 = vunpack.c.l.b16 %v241
        %v322 = vunpack.c.l.b16 %v242
        %v323 = vunpack.c.l.b16 %v243
        %v324 = vunpack.c.l.b16 %v244
        %v325 = vunpack.c.l.b16 %v245
        %v326 = vunpack.c.l.b16 %v246
        %v327 = vunpack.c.l.b16 %v247
        %v328 = vunpack.c.l.b16 %v248
        %v329 = vunpack.c.l.b16 %v249
        %v330 = vpack.c.b16 %v299, %v298
        %v331 = vpack.c.b16 %v301, %v300
        %v332 = vpack.c.b16 %v303, %v302
        %v333 = vpack.c.b16 %v305, %v304
        %v334 = vpack.c.b16 %v307, %v306
        %v335 = vpack.c.b16 %v309, %v308
        %v336 = vpack.c.b16 %v311, %v310
        %v337 = vpack.c.b16 %v313, %v312
        %v338 = vpack.c.b16 %v315, %v314
        %v339 = vpack.c.b16 %v317, %v316
        %v340 = vpack.c.b16 %v319, %v318
        %v341 = vpack.c.b16 %v321, %v320
        %v342 = vpack.c.b16 %v323, %v322
        %v343 = vpack.c.b16 %v325, %v324
        %v344 = vpack.c.b16 %v327, %v326
        %v345 = vpack.c.b16 %v329, %v328
        %v378 = vunpack.c.l.b16 %v250
        %v379 = vunpack.c.l.b16 %v251
        %v380 = vunpack.c.l.b16 %v252
        %v381 = vunpack.c.l.b16 %v253
        %v382 = vunpack.c.l.b16 %v254
        %v383 = vunpack.c.l.b16 %v255
        %v384 = vunpack.c.l.b16 %v256
        %v385 = vunpack.c.l.b16 %v257
        %v386 = vunpack.c.l.b16 %v258
        %v387 = vunpack.c.l.b16 %v259
        %v388 = vunpack.c.l.b16 %v260
        %v389 = vunpack.c.l.b16 %v261
        %v390 = vunpack.c.l.b16 %v262
        %v391 = vunpack.c.l.b16 %v263
        %v392 = vunpack.c.l.b16 %v264
        %v393 = vunpack.c.l.b16 %v265
        %v394 = vpack.c.b16 %v379, %v378
        %v395 = vpack.c.b16 %v381, %v380
        %v396 = vpack.c.b16 %v383, %v382
        %v397 = vpack.c.b16 %v385, %v384
        %v398 = vpack.c.b16 %v387, %v386
        %v399 = vpack.c.b16 %v389, %v388
        %v400 = vpack.c.b16 %v391, %v390
        %v401 = vpack.c.b16 %v393, %v392
        %410 = vmatprep.subr.bf16.mxu0 0
        %411 = vmatpush1.bf16.msra.mxu0 %v401
        %412 = vmatprep.subr.bf16.mxu0 0
        %413 = vmatpush1.bf16.msra.mxu0 %v400
        %414 = vmatprep.subr.bf16.mxu0 0
        %415 = vmatpush1.bf16.msra.mxu0 %v399
        %416 = vmatprep.subr.bf16.mxu0 0
        %417 = vmatpush1.bf16.msra.mxu0 %v398
        %418 = vmatprep.subr.bf16.mxu0 0
        %419 = vmatpush1.bf16.msra.mxu0 %v397
        %420 = vmatprep.subr.bf16.mxu0 0
        %421 = vmatpush1.bf16.msra.mxu0 %v396
        %422 = vmatprep.subr.bf16.mxu0 0
        %423 = vmatpush1.bf16.msra.mxu0 %v395
        %424 = vmatprep.subr.bf16.mxu0 0
        %425 = vmatpush1.bf16.msra.mxu0 %v394
        %426 = vmatprep.subr.bf16.mxu0 0
        %427 = vmatpush2.bf16.msra.mxu0 0
        %428 = vmatprep.subr.bf16.mxu0 0
        %429 = vmatpush2.bf16.msra.mxu0 0
        %430 = vmatprep.subr.bf16.mxu0 0
        %431 = vmatpush2.bf16.msra.mxu0 0
        %432 = vmatprep.subr.bf16.mxu0 0
        %433 = vmatpush2.bf16.msra.mxu0 0
        %434 = vmatprep.subr.bf16.mxu0 0
        %435 = vmatpush2.bf16.msra.mxu0 0
        %436 = vmatprep.subr.bf16.mxu0 0
        %437 = vmatpush2.bf16.msra.mxu0 0
        %438 = vmatprep.subr.bf16.mxu0 0
        %439 = vmatpush2.bf16.msra.mxu0 0
        %440 = vmatprep.subr.bf16.mxu0 0
        %441 = vmatpush2.bf16.msra.mxu0 0
        %442 = vmatprep.mubr.bf16.mxu0 0
        %443 = vmatmul.mubr.bf16.gmra.mxu0 %v330
        %v444 = vpop.f32.mrf.mxu0
        %v445 = vadd.f32 0.0, %v444
        %v446 = vpop.f32.mrf.mxu0
        %v447 = vpop.f32.mrf.mxu0
        %v448 = vadd.f32 0.0, %v447
        %v449 = vpop.f32.mrf.mxu0
        %450 = vmatprep.mubr.bf16.mxu0 0
        %451 = vmatmul.mubr.bf16.gmra.mxu0 %v331
        %v452 = vpop.f32.mrf.mxu0
        %v453 = vadd.f32 0.0, %v452
        %v454 = vpop.f32.mrf.mxu0
        %v455 = vpop.f32.mrf.mxu0
        %v456 = vadd.f32 0.0, %v455
        %v457 = vpop.f32.mrf.mxu0
        %458 = vmatprep.mubr.bf16.mxu0 0
        %459 = vmatmul.mubr.bf16.gmra.mxu0 %v332
        %v460 = vpop.f32.mrf.mxu0
        %v461 = vadd.f32 0.0, %v460
        %v462 = vpop.f32.mrf.mxu0
        %v463 = vpop.f32.mrf.mxu0
        %v464 = vadd.f32 0.0, %v463
        %v465 = vpop.f32.mrf.mxu0
        %466 = vmatprep.mubr.bf16.mxu0 0
        %467 = vmatmul.mubr.bf16.gmra.mxu0 %v333
        %v468 = vpop.f32.mrf.mxu0
        %v469 = vadd.f32 0.0, %v468
        %v470 = vpop.f32.mrf.mxu0
        %v471 = vpop.f32.mrf.mxu0
        %v472 = vadd.f32 0.0, %v471
        %v473 = vpop.f32.mrf.mxu0
        %474 = vmatprep.mubr.bf16.mxu0 0
        %475 = vmatmul.mubr.bf16.gmra.mxu0 %v334
        %v476 = vpop.f32.mrf.mxu0
        %v477 = vadd.f32 0.0, %v476
        %v478 = vpop.f32.mrf.mxu0
        %v479 = vpop.f32.mrf.mxu0
        %v480 = vadd.f32 0.0, %v479
        %v481 = vpop.f32.mrf.mxu0
        %482 = vmatprep.mubr.bf16.mxu0 0
        %483 = vmatmul.mubr.bf16.gmra.mxu0 %v335
        %v484 = vpop.f32.mrf.mxu0
        %v485 = vadd.f32 0.0, %v484
        %v486 = vpop.f32.mrf.mxu0
        %v487 = vpop.f32.mrf.mxu0
        %v488 = vadd.f32 0.0, %v487
        %v489 = vpop.f32.mrf.mxu0
        %490 = vmatprep.mubr.bf16.mxu0 0
        %491 = vmatmul.mubr.bf16.gmra.mxu0 %v336
        %v492 = vpop.f32.mrf.mxu0
        %v493 = vadd.f32 0.0, %v492
        %v494 = vpop.f32.mrf.mxu0
        %v495 = vpop.f32.mrf.mxu0
        %v496 = vadd.f32 0.0, %v495
        %v497 = vpop.f32.mrf.mxu0
        %498 = vmatprep.mubr.bf16.mxu0 0
        %499 = vmatmul.mubr.bf16.gmra.mxu0 %v337
        %v500 = vpop.f32.mrf.mxu0
        %v501 = vadd.f32 0.0, %v500
        %v502 = vpop.f32.mrf.mxu0
        %v503 = vpop.f32.mrf.mxu0
        %v504 = vadd.f32 0.0, %v503
        %v505 = vpop.f32.mrf.mxu0
        %506 = vmatprep.mubr.bf16.mxu0 0
        %507 = vmatmul.mubr.bf16.gmra.mxu0 %v338
        %v508 = vpop.f32.mrf.mxu0
        %v509 = vadd.f32 0.0, %v508
        %v510 = vpop.f32.mrf.mxu0
        %v511 = vpop.f32.mrf.mxu0
        %v512 = vadd.f32 0.0, %v511
        %v513 = vpop.f32.mrf.mxu0
        %514 = vmatprep.mubr.bf16.mxu0 0
        %515 = vmatmul.mubr.bf16.gmra.mxu0 %v339
        %v516 = vpop.f32.mrf.mxu0
        %v517 = vadd.f32 0.0, %v516
        %v518 = vpop.f32.mrf.mxu0
        %v519 = vpop.f32.mrf.mxu0
        %v520 = vadd.f32 0.0, %v519
        %v521 = vpop.f32.mrf.mxu0
        %522 = vmatprep.mubr.bf16.mxu0 0
        %523 = vmatmul.mubr.bf16.gmra.mxu0 %v340
        %v524 = vpop.f32.mrf.mxu0
        %v525 = vadd.f32 0.0, %v524
        %v526 = vpop.f32.mrf.mxu0
        %v527 = vpop.f32.mrf.mxu0
        %v528 = vadd.f32 0.0, %v527
        %v529 = vpop.f32.mrf.mxu0
        %530 = vmatprep.mubr.bf16.mxu0 0
        %531 = vmatmul.mubr.bf16.gmra.mxu0 %v341
        %v532 = vpop.f32.mrf.mxu0
        %v533 = vadd.f32 0.0, %v532
        %v534 = vpop.f32.mrf.mxu0
        %v535 = vpop.f32.mrf.mxu0
        %v536 = vadd.f32 0.0, %v535
        %v537 = vpop.f32.mrf.mxu0
        %538 = vmatprep.mubr.bf16.mxu0 0
        %539 = vmatmul.mubr.bf16.gmra.mxu0 %v342
        %v540 = vpop.f32.mrf.mxu0
        %v541 = vadd.f32 0.0, %v540
        %v542 = vpop.f32.mrf.mxu0
        %v543 = vpop.f32.mrf.mxu0
        %v544 = vadd.f32 0.0, %v543
        %v545 = vpop.f32.mrf.mxu0
        %546 = vmatprep.mubr.bf16.mxu0 0
        %547 = vmatmul.mubr.bf16.gmra.mxu0 %v343
        %v548 = vpop.f32.mrf.mxu0
        %v549 = vadd.f32 0.0, %v548
        %v550 = vpop.f32.mrf.mxu0
        %v551 = vpop.f32.mrf.mxu0
        %v552 = vadd.f32 0.0, %v551
        %v553 = vpop.f32.mrf.mxu0
        %554 = vmatprep.mubr.bf16.mxu0 0
        %555 = vmatmul.mubr.bf16.gmra.mxu0 %v344
        %v556 = vpop.f32.mrf.mxu0
        %v557 = vadd.f32 0.0, %v556
        %v558 = vpop.f32.mrf.mxu0
        %v559 = vpop.f32.mrf.mxu0
        %v560 = vadd.f32 0.0, %v559
        %v561 = vpop.f32.mrf.mxu0
        %562 = vmatprep.mubr.bf16.mxu0 0
        %563 = vmatmul.mubr.bf16.gmra.mxu0 %v345
        %v564 = vpop.f32.mrf.mxu0
        %v565 = vadd.f32 0.0, %v564
        %v566 = vpop.f32.mrf.mxu0
        %v567 = vpop.f32.mrf.mxu0
        %v568 = vadd.f32 0.0, %v567
        %v569 = vpop.f32.mrf.mxu0
        %570 = vdwg.mxu0
        %v571 = vpack.c.bf16 %v448, %v445
        %v572 = vpack.c.bf16 %v456, %v453
        %v573 = vpack.c.bf16 %v464, %v461
        %v574 = vpack.c.bf16 %v472, %v469
        %v575 = vpack.c.bf16 %v480, %v477
        %v576 = vpack.c.bf16 %v488, %v485
        %v577 = vpack.c.bf16 %v496, %v493
        %v578 = vpack.c.bf16 %v504, %v501
        %v579 = vpack.c.bf16 %v512, %v509
        %v580 = vpack.c.bf16 %v520, %v517
        %v581 = vpack.c.bf16 %v528, %v525
        %v582 = vpack.c.bf16 %v536, %v533
        %v583 = vpack.c.bf16 %v544, %v541
        %v584 = vpack.c.bf16 %v552, %v549
        %v585 = vpack.c.bf16 %v560, %v557
        %v586 = vpack.c.bf16 %v568, %v565
        %v603 = vunpack.c.l.b16 %v571
        %v604 = vunpack.c.h.b16 %v571
        %v605 = vunpack.c.l.b16 %v572
        %v606 = vunpack.c.h.b16 %v572
        %v607 = vunpack.c.l.b16 %v573
        %v608 = vunpack.c.h.b16 %v573
        %v609 = vunpack.c.l.b16 %v574
        %v610 = vunpack.c.h.b16 %v574
        %v611 = vunpack.c.l.b16 %v575
        %v612 = vunpack.c.h.b16 %v575
        %v613 = vunpack.c.l.b16 %v576
        %v614 = vunpack.c.h.b16 %v576
        %v615 = vunpack.c.l.b16 %v577
        %v616 = vunpack.c.h.b16 %v577
        %v617 = vunpack.c.l.b16 %v578
        %v618 = vunpack.c.h.b16 %v578
        %v619 = vunpack.c.l.b16 %v579
        %v620 = vunpack.c.h.b16 %v579
        %v621 = vunpack.c.l.b16 %v580
        %v622 = vunpack.c.h.b16 %v580
        %v623 = vunpack.c.l.b16 %v581
        %v624 = vunpack.c.h.b16 %v581
        %v625 = vunpack.c.l.b16 %v582
        %v626 = vunpack.c.h.b16 %v582
        %v627 = vunpack.c.l.b16 %v583
        %v628 = vunpack.c.h.b16 %v583
        %v629 = vunpack.c.l.b16 %v584
        %v630 = vunpack.c.h.b16 %v584
        %v631 = vunpack.c.l.b16 %v585
        %v632 = vunpack.c.h.b16 %v585
        %v633 = vunpack.c.l.b16 %v586
        %v634 = vunpack.c.h.b16 %v586
        %v635 = vpack.c.b16 %v603, %v603
        %v636 = vpack.c.b16 %v604, %v604
        %v637 = vpack.c.b16 %v605, %v605
        %v638 = vpack.c.b16 %v606, %v606
        %v639 = vpack.c.b16 %v607, %v607
        %v640 = vpack.c.b16 %v608, %v608
        %v641 = vpack.c.b16 %v609, %v609
        %v642 = vpack.c.b16 %v610, %v610
        %v643 = vpack.c.b16 %v611, %v611
        %v644 = vpack.c.b16 %v612, %v612
        %v645 = vpack.c.b16 %v613, %v613
        %v646 = vpack.c.b16 %v614, %v614
        %v647 = vpack.c.b16 %v615, %v615
        %v648 = vpack.c.b16 %v616, %v616
        %v649 = vpack.c.b16 %v617, %v617
        %v650 = vpack.c.b16 %v618, %v618
        %v651 = vpack.c.b16 %v619, %v619
        %v652 = vpack.c.b16 %v620, %v620
        %v653 = vpack.c.b16 %v621, %v621
        %v654 = vpack.c.b16 %v622, %v622
        %v655 = vpack.c.b16 %v623, %v623
        %v656 = vpack.c.b16 %v624, %v624
        %v657 = vpack.c.b16 %v625, %v625
        %v658 = vpack.c.b16 %v626, %v626
        %v659 = vpack.c.b16 %v627, %v627
        %v660 = vpack.c.b16 %v628, %v628
        %v661 = vpack.c.b16 %v629, %v629
        %v662 = vpack.c.b16 %v630, %v630
        %v663 = vpack.c.b16 %v631, %v631
        %v664 = vpack.c.b16 %v632, %v632
        %v665 = vpack.c.b16 %v633, %v633
        %v666 = vpack.c.b16 %v634, %v634
        %699 = vst [vmem:[%s207] sm:$0xf] %v635
        %700 = vst [vmem:[%s207 + $0x4] sm:$0xf] %v636
        %701 = vst [vmem:[%s207 + $0x8] sm:$0xf] %v637
        %702 = vst [vmem:[%s207 + $0xc] sm:$0xf] %v638
        %703 = vst [vmem:[%s207 + $0x10] sm:$0xf] %v639
        %704 = vst [vmem:[%s207 + $0x14] sm:$0xf] %v640
        %705 = vst [vmem:[%s207 + $0x18] sm:$0xf] %v641
        %706 = vst [vmem:[%s207 + $0x1c] sm:$0xf] %v642
        %707 = vst [vmem:[%s207 + $0x20] sm:$0xf] %v643
        %708 = vst [vmem:[%s207 + $0x24] sm:$0xf] %v644
        %709 = vst [vmem:[%s207 + $0x28] sm:$0xf] %v645
        %710 = vst [vmem:[%s207 + $0x2c] sm:$0xf] %v646
        %711 = vst [vmem:[%s207 + $0x30] sm:$0xf] %v647
        %712 = vst [vmem:[%s207 + $0x34] sm:$0xf] %v648
        %713 = vst [vmem:[%s207 + $0x38] sm:$0xf] %v649
        %714 = vst [vmem:[%s207 + $0x3c] sm:$0xf] %v650
        %715 = vst [vmem:[%s207 + $0x40] sm:$0xf] %v651
        %716 = vst [vmem:[%s207 + $0x44] sm:$0xf] %v652
        %717 = vst [vmem:[%s207 + $0x48] sm:$0xf] %v653
        %718 = vst [vmem:[%s207 + $0x4c] sm:$0xf] %v654
        %719 = vst [vmem:[%s207 + $0x50] sm:$0xf] %v655
        %720 = vst [vmem:[%s207 + $0x54] sm:$0xf] %v656
        %721 = vst [vmem:[%s207 + $0x58] sm:$0xf] %v657
        %722 = vst [vmem:[%s207 + $0x5c] sm:$0xf] %v658
        %723 = vst [vmem:[%s207 + $0x60] sm:$0xf] %v659
        %724 = vst [vmem:[%s207 + $0x64] sm:$0xf] %v660
        %725 = vst [vmem:[%s207 + $0x68] sm:$0xf] %v661
        %726 = vst [vmem:[%s207 + $0x6c] sm:$0xf] %v662
        %727 = vst [vmem:[%s207 + $0x70] sm:$0xf] %v663
        %728 = vst [vmem:[%s207 + $0x74] sm:$0xf] %v664
        %729 = vst [vmem:[%s207 + $0x78] sm:$0xf] %v665
        %730 = vst [vmem:[%s207 + $0x7c] sm:$0xf] %v666
        %v731 = vadd.f32 %v445, %v448
        %v732 = vadd.f32 %v731, %v453
        %v733 = vadd.f32 %v732, %v456
        %v734 = vadd.f32 %v733, %v461
        %v735 = vadd.f32 %v734, %v464
        %v736 = vadd.f32 %v735, %v469
        %v737 = vadd.f32 %v736, %v472
        %v738 = vadd.f32 %v737, %v477
        %v739 = vadd.f32 %v738, %v480
        %v740 = vadd.f32 %v739, %v485
        %v741 = vadd.f32 %v740, %v488
        %v742 = vadd.f32 %v741, %v493
        %v743 = vadd.f32 %v742, %v496
        %v744 = vadd.f32 %v743, %v501
        %v745 = vadd.f32 %v744, %v504
        %v746 = vadd.f32 %v745, %v509
        %v747 = vadd.f32 %v746, %v512
        %v748 = vadd.f32 %v747, %v517
        %v749 = vadd.f32 %v748, %v520
        %v750 = vadd.f32 %v749, %v525
        %v751 = vadd.f32 %v750, %v528
        %v752 = vadd.f32 %v751, %v533
        %v753 = vadd.f32 %v752, %v536
        %v754 = vadd.f32 %v753, %v541
        %v755 = vadd.f32 %v754, %v544
        %v756 = vadd.f32 %v755, %v549
        %v757 = vadd.f32 %v756, %v552
        %v758 = vadd.f32 %v757, %v557
        %v759 = vadd.f32 %v758, %v560
        %v760 = vadd.f32 %v759, %v565
        %v761 = vadd.f32 %v760, %v568
        %v762 = vrot.slane %v761, 4
        %v763 = vadd.f32 %v761, %v762
        %v764 = vrot.slane %v763, 2
        %v765 = vadd.f32 %v763, %v764
        %v766 = vrot.slane %v765, 1
        %v767 = vadd.f32 %v765, %v766
        %768 = vst [vmem:[%s214] sm:$0x1] %v767
        %v769 = vmul.f32 %v445, %v445
        %v770 = vmul.f32 %v448, %v448
        %v771 = vmul.f32 %v453, %v453
        %v772 = vmul.f32 %v456, %v456
        %v773 = vmul.f32 %v461, %v461
        %v774 = vmul.f32 %v464, %v464
        %v775 = vmul.f32 %v469, %v469
        %v776 = vmul.f32 %v472, %v472
        %v777 = vmul.f32 %v477, %v477
        %v778 = vmul.f32 %v480, %v480
        %v779 = vmul.f32 %v485, %v485
        %v780 = vmul.f32 %v488, %v488
        %v781 = vmul.f32 %v493, %v493
        %v782 = vmul.f32 %v496, %v496
        %v783 = vmul.f32 %v501, %v501
        %v784 = vmul.f32 %v504, %v504
        %v785 = vmul.f32 %v509, %v509
        %v786 = vmul.f32 %v512, %v512
        %v787 = vmul.f32 %v517, %v517
        %v788 = vmul.f32 %v520, %v520
        %v789 = vmul.f32 %v525, %v525
        %v790 = vmul.f32 %v528, %v528
        %v791 = vmul.f32 %v533, %v533
        %v792 = vmul.f32 %v536, %v536
        %v793 = vmul.f32 %v541, %v541
        %v794 = vmul.f32 %v544, %v544
        %v795 = vmul.f32 %v549, %v549
        %v796 = vmul.f32 %v552, %v552
        %v797 = vmul.f32 %v557, %v557
        %v798 = vmul.f32 %v560, %v560
        %v799 = vmul.f32 %v565, %v565
        %v800 = vmul.f32 %v568, %v568
        %v801 = vadd.f32 %v769, %v770
        %v802 = vadd.f32 %v801, %v771
        %v803 = vadd.f32 %v802, %v772
        %v804 = vadd.f32 %v803, %v773
        %v805 = vadd.f32 %v804, %v774
        %v806 = vadd.f32 %v805, %v775
        %v807 = vadd.f32 %v806, %v776
        %v808 = vadd.f32 %v807, %v777
        %v809 = vadd.f32 %v808, %v778
        %v810 = vadd.f32 %v809, %v779
        %v811 = vadd.f32 %v810, %v780
        %v812 = vadd.f32 %v811, %v781
        %v813 = vadd.f32 %v812, %v782
        %v814 = vadd.f32 %v813, %v783
        %v815 = vadd.f32 %v814, %v784
        %v816 = vadd.f32 %v815, %v785
        %v817 = vadd.f32 %v816, %v786
        %v818 = vadd.f32 %v817, %v787
        %v819 = vadd.f32 %v818, %v788
        %v820 = vadd.f32 %v819, %v789
        %v821 = vadd.f32 %v820, %v790
        %v822 = vadd.f32 %v821, %v791
        %v823 = vadd.f32 %v822, %v792
        %v824 = vadd.f32 %v823, %v793
        %v825 = vadd.f32 %v824, %v794
        %v826 = vadd.f32 %v825, %v795
        %v827 = vadd.f32 %v826, %v796
        %v828 = vadd.f32 %v827, %v797
        %v829 = vadd.f32 %v828, %v798
        %v830 = vadd.f32 %v829, %v799
        %v831 = vadd.f32 %v830, %v800
        %v832 = vrot.slane %v831, 4
        %v833 = vadd.f32 %v831, %v832
        %v834 = vrot.slane %v833, 2
        %v835 = vadd.f32 %v833, %v834
        %v836 = vrot.slane %v835, 1
        %v837 = vadd.f32 %v835, %v836
        %838 = vst [vmem:[%s214 + $0x1] sm:$0x1] %v837
        %s839 = sand.u32 %s80, 1
        %s840 = scalar_lea.sflag [#allocation4], %s839
        %s841 = sand.u32 %s80, 1
        %s842 = smul.addr %s841, 128
        %s843 = scalar_lea.vmem [#allocation7], %s842
        %s844 = sand.u32 %s106, 1
        %s845 = scalar_lea.sflag [#allocation9], %s844
        %s846 = sand.u32 %s106, 1
        %s847 = smul.addr %s846, 8
        %s848 = scalar_lea.vmem [#allocation8], %s847
        // Predicated region
        $region37: #{tpu_custom_call.1} parent=27 // pred_check
          %p849 = pneg %p90
        $region38: #{tpu_custom_call.1} parent=27 // pred_check_branch
          %851 = sbr.rel (%p849) target = $region40
        $region39: #{tpu_custom_call.1} parent=27 // pred_region
          %s852 = smul.u32 32, %s25
          %s854 = ssub.s32 2048, 2048
          %855 = vsyncadd %s840, %s854
          %s856 = smul.addr %s852, 64
          %s857 = scalar_lea.hbm %s2, %s856
          %s858 = sshll.u32 %s843, 4
          %s859 = int_to_ptr.vmem [resolvable:$true] %s858
          %864 = dma.vmem_to_hbm [thread:$0]  %s859, 2048, %s857, %s840, 64, 64, 4
        $region40: #{tpu_custom_call.1} parent=27 // pred_fallthru
          _
        // Predicated region
        $region41: #{tpu_custom_call.1} parent=27 // pred_check
          %p865 = pneg %p116
        $region42: #{tpu_custom_call.1} parent=27 // pred_check_branch
          %867 = sbr.rel (%p865) target = $region44
        $region43: #{tpu_custom_call.1} parent=27 // pred_region
          %s869 = ssub.s32 128, 128
          %870 = vsyncadd %s845, %s869
          %s871 = smul.addr %s25, 128
          %s872 = scalar_lea.hbm %s3, %s871
          %s874 = sshll.u32 %s848, 4
          %s875 = int_to_ptr.vmem [resolvable:$true] %s874
          %877 = dma.vmem_to_hbm [thread:$0]  %s875, 128, %s872, %s845
        $region44: #{tpu_custom_call.1} parent=27 // pred_fallthru
          _
      $region28: #{tpu_custom_call.1} parent=5 // pred_fallthru
        _
      %p878 = scmp.le.s32.totalorder 2, %s20
      // Predicated region
      $region45: #{tpu_custom_call.1} parent=5 // pred_check
        %p879 = pneg %p878
      $region46: #{tpu_custom_call.1} parent=5 // pred_check_branch
        %881 = sbr.rel (%p879) target = $region48
      $region47: #{tpu_custom_call.1} parent=5 // pred_region
        %s882 = ssub.s32 %s20, 2
        // Predicated region
        $region49: #{tpu_custom_call.1} parent=47 // pred_check
          %p883 = pneg %p96
        $region50: #{tpu_custom_call.1} parent=47 // pred_check_branch
          %885 = sbr.rel (%p883) target = $region52
        $region51: #{tpu_custom_call.1} parent=47 // pred_region
          %s886 = sand.u32 %s81, 1
          %s887 = scalar_lea.sflag [#allocation4], %s886
          %s888 = sand.u32 %s81, 1
          %s889 = smul.addr %s888, 128
          %s890 = scalar_lea.vmem [#allocation7], %s889
          %891 = dma.done %s887, 2048
        $region52: #{tpu_custom_call.1} parent=47 // pred_fallthru
          _
        // Predicated region
        $region53: #{tpu_custom_call.1} parent=47 // pred_check
          %p892 = pneg %p122
        $region54: #{tpu_custom_call.1} parent=47 // pred_check_branch
          %894 = sbr.rel (%p892) target = $region56
        $region55: #{tpu_custom_call.1} parent=47 // pred_region
          %s895 = sand.u32 %s107, 1
          %s896 = scalar_lea.sflag [#allocation9], %s895
          %s897 = sand.u32 %s107, 1
          %s898 = smul.addr %s897, 8
          %s899 = scalar_lea.vmem [#allocation8], %s898
          %900 = dma.done %s896, 128
        $region56: #{tpu_custom_call.1} parent=47 // pred_fallthru
          _
      $region48: #{tpu_custom_call.1} parent=5 // pred_fallthru
        _
    $region6: #{tpu_custom_call.1} parent=1 // loop_footer
      %s24 = sadd.s32 1, %s20
    $region7: #{tpu_custom_call.1} parent=1 // loop_footer_branch
      %19 = sbr.rel target = $region3
    $region8: #{tpu_custom_call.1} parent=1 // loop_exit
      _
    %901 = vsyncpa [#allocation3], 1
    %s902 = scalar_lea.sflag [#allocation3], 1
    %903 = vsyncpa %s902, 1
    %904 = vsyncpa [#allocation6], 1
    %905 = vsyncpa [#allocation4], 1
    %s906 = scalar_lea.sflag [#allocation4], 1
    %907 = vsyncpa %s906, 1
    %908 = vsyncpa [#allocation9], 1
    %s909 = scalar_lea.sflag [#allocation9], 1
    %910 = vsyncpa %s909, 1

</llo_original>
